<compile_context>
chip_gen: v7x
topology: tpu7x:2x2x1
jax: 0.10.0
libtpu: 0.0.40
codegen_flags: <defaults>
</compile_context>

<pallas_src>
import jax
import jax.numpy as jnp
from jax import lax
from jax.experimental import pallas as pl
from jax.experimental.pallas import tpu as pltpu


def _round_up(a: int, b: int) -> int:
    return (a + b - 1) // b * b


def prepare_kan_table(word_w, know_w, *, dtype=None):
    """Fuse the word/knowledge tables once (module-init analogue).

    Returns a (Vp, F) table with Vp = round_up(V, 128) zero-padded rows so the
    one-hot matmul contraction dim is MXU friendly.  Optionally cast to
    `dtype` (e.g. jnp.bfloat16) to halve the VMEM-resident footprint and the
    output HBM writeback.
    """
    V, _ = word_w.shape
    V2, _ = know_w.shape
    assert V == V2, "vocab sizes must match"
    table = jnp.concatenate([word_w, know_w], axis=-1)     # (V, E + K)
    if dtype is not None:
        table = table.astype(dtype)
    Vp = _round_up(V, 128)
    if Vp != V:
        table = jnp.pad(table, ((0, Vp - V), (0, 0)))      # padded rows are zero
    return table


def _kan_embed_kernel(ids_ref, table_ref, out_ref):
    # ids_ref   : (T, 1) int32 VMEM block - token ids for this block (column).
    # table_ref : (Vp, F) fused embedding table, whole-array VMEM resident.
    # out_ref   : (T, F)  output slab for this grid step.
    T = out_ref.shape[0]
    Vp = table_ref.shape[0]
    ids = ids_ref[...]                                          # (T, 1) int32
    vocab_iota = lax.broadcasted_iota(jnp.int32, (T, Vp), 1)    # lane idx = vocab id
    one_hot = (vocab_iota == ids).astype(table_ref.dtype)       # (T, Vp)
    # Exact gather via the MXU: each one-hot row selects exactly one table row;
    # HIGHEST precision keeps the f32 path bit-exact (0/1 weights, f32 acc).
    out_ref[...] = jnp.dot(
        one_hot,
        table_ref[...],
        precision=lax.Precision.HIGHEST,
        preferred_element_type=jnp.float32,
    ).astype(out_ref.dtype)


def _vmem_need_bytes(T, Vp, F, itemsize):
    F_l = _round_up(F, 128)                     # VMEM lane padding of features
    table_vmem = Vp * F_l * itemsize            # single copy (resident, unbuffered)
    out_vmem = 2 * T * F_l * itemsize           # double-buffered output blocks
    ids_vmem = 2 * T * 128 * 4                  # (T, 1) int32 blocks, lane-padded
    onehot_vmem = T * Vp * (itemsize + 4)       # one_hot + iota intermediates
    return table_vmem + out_vmem + ids_vmem + onehot_vmem + (2 << 20)


def kan_embedding(x, table, *, tokens_per_block=1024):
    """x: (B, S) int ids; table: (Vp, F) from prepare_kan_table -> (B, S, F)."""
    B, S = x.shape
    Vp, F = table.shape
    dtype = table.dtype
    itemsize = dtype.itemsize

    if Vp > 4096:
        # TODO(synk): large vocabularies need a DMA-gather path (table with
        # memory_space=pl.ANY + batched pltpu.make_async_copy row fetches); the
        # one-hot MXU path wastes O(V) flops/token beyond a few K rows.
        raise NotImplementedError("one-hot MXU path supports vocab (padded) <= 4096")

    # Generation-aware VMEM budget (v5e/v6e: 128 MiB; v7x: 64 MiB per core).
    try:
        vmem_cap = int(pltpu.get_tpu_info().vmem_capacity_bytes)
    except Exception:
        vmem_cap = 64 * 1024 * 1024
    budget = int(0.75 * vmem_cap)

    # Token tiling: T multiple of 8; prefer >= 2 blocks so ("parallel",) can
    # shard across both TensorCores on v7x; shrink T if VMEM is tight.
    N = B * S
    T = _round_up(min(int(tokens_per_block), _round_up(N, 8)), 8)
    if _round_up(N, T) == T and N > 8:
        T = _round_up(pl.cdiv(N, 2), 8)
    while _vmem_need_bytes(T, Vp, F, itemsize) > budget and T > 64:
        T = _round_up(max(64, T // 2), 8)
    vmem_need = _vmem_need_bytes(T, Vp, F, itemsize)
    if vmem_need > budget:
        # TODO(synk): table too large to keep VMEM resident on this generation;
        # needs the DMA-gather fallback noted above.
        raise NotImplementedError("embedding table too large for VMEM-resident path")
    Np = _round_up(N, T)

    ids = x.reshape(N).astype(jnp.int32)
    if Np != N:
        ids = jnp.pad(ids, (0, Np - N))          # padded tokens -> row 0, sliced off
    ids = ids.reshape(Np, 1)

    grid = (Np // T,)
    out = pl.pallas_call(
        _kan_embed_kernel,
        out_shape=jax.ShapeDtypeStruct((Np, F), dtype),
        grid=grid,
        in_specs=[
            # Per-block token ids (tiny, double-buffered automatically).
            pl.BlockSpec((T, 1), lambda i: (i, 0)),
            # Whole fused table: VMEM resident, single-buffered, fetched once.
            pl.BlockSpec(memory_space=pltpu.MemorySpace.VMEM),
        ],
        out_specs=pl.BlockSpec((T, F), lambda i: (i, 0)),
        compiler_params=pltpu.CompilerParams(
            dimension_semantics=("parallel",),
            vmem_limit_bytes=int(min(budget, max(2 * vmem_need, 32 * 1024 * 1024))),
        ),
    )(ids, table)

    if Np != N:
        out = out[:N]
    return out.reshape(B, S, F)


if __name__ == "__main__":
    # Small deterministic setup consistent with the module's __init__.
    vocab_size = 50
    embedding_dim = 32     # word embedding dim (E)
    knowledge_dim = 16     # knowledge embedding dim (K)
    B, S = 2, 8

    key = jax.random.PRNGKey(0)
    k_word, k_know, k_ids = jax.random.split(key, 3)

    # nn.Embedding default init: N(0, 1)
    word_w = jax.random.normal(k_word, (vocab_size, embedding_dim), jnp.float32)
    know_w = jax.random.normal(k_know, (vocab_size, knowledge_dim), jnp.float32)
    x = jax.random.randint(k_ids, (B, S), 0, vocab_size, dtype=jnp.int32)

    # Fuse/pad the tables once (module init), then run the kernel.
    table = prepare_kan_table(word_w, know_w)
    out = kan_embedding(x, table)
    out = jax.block_until_ready(out)

    # Pure-JAX reference of the forward semantics.
    ref = jnp.concatenate([word_w[x], know_w[x]], axis=-1)
    assert out.shape == (B, S, embedding_dim + knowledge_dim)
    assert out.dtype == ref.dtype
    assert jnp.allclose(out, ref, atol=1e-5, rtol=1e-5), "mismatch vs reference"

    print("KERNEL_OK")
</pallas_src>

<mosaic_0001>
module attributes {stable_mosaic.version = 11 : i64} {
  func.func @_kan_embed_kernel(%arg0: i32, %arg1: memref<8x1xi32, #tpu.memory_space<vmem>>, %arg2: memref<128x48xf32, #tpu.memory_space<vmem>>, %arg3: memref<8x48xf32, #tpu.memory_space<vmem>>) attributes {dimension_semantics = [#tpu.dimension_semantics<parallel>], iteration_bounds = array<i64: 2>, scalar_prefetch = 0 : i64, scratch_operands = 0 : i64, tpu.core_type = #tpu.core_type<tc>, window_params = [{transform_indices = @transform_0, window_bounds = array<i64: 8, 1>}, {pipeline_mode = #tpu.pipeline_mode<synchronous>, transform_indices = @transform_1, window_bounds = array<i64: 128, 48>}, {transform_indices = @transform_2, window_bounds = array<i64: 8, 48>}]} {
    %c0 = arith.constant 0 : index
    %c0_0 = arith.constant 0 : index
    %0 = vector.load %arg1[%c0, %c0_0] : memref<8x1xi32, #tpu.memory_space<vmem>>, vector<8x1xi32>
    %1 = tpu.iota {dimensions = array<i32: 1>} : vector<8x128xi32>
    %2 = vector.broadcast %0 : vector<8x1xi32> to vector<8x128xi32>
    %3 = arith.cmpi eq, %1, %2 : vector<8x128xi32>
    %4 = arith.extui %3 : vector<8x128xi1> to vector<8x128xi32>
    %5 = arith.sitofp %4 : vector<8x128xi32> to vector<8x128xf32>
    %c0_1 = arith.constant 0 : index
    %c0_2 = arith.constant 0 : index
    %6 = vector.load %arg2[%c0_1, %c0_2] : memref<128x48xf32, #tpu.memory_space<vmem>>, vector<128x48xf32>
    %cst = arith.constant dense<0.000000e+00> : vector<8x48xf32>
    %7 = tpu.matmul %5, %6, %cst {dimension_numbers = #tpu.dot_dimension_numbers<[1], [0], [0], [1], [0, 0, 1, 1], [], []>, precision = #tpu.contract_precision<fp32>} : vector<8x128xf32>, vector<128x48xf32>, vector<8x48xf32> -> vector<8x48xf32>
    %c0_3 = arith.constant 0 : index
    %c0_4 = arith.constant 0 : index
    %8 = vector.load %arg3[%c0_3, %c0_4] : memref<8x48xf32, #tpu.memory_space<vmem>>, vector<8x48xf32>
    tpu.vector_store %arg3[%c0_3, %c0_4], %7 {strides = array<i32>} : memref<8x48xf32, #tpu.memory_space<vmem>>, vector<8x48xf32>,
    return
  }
  func.func @transform_0(%arg0: i32) -> (i32, i32) {
    %c0_i32 = arith.constant 0 : i32
    %c0_i32_0 = arith.constant 0 : i32
    return %arg0, %c0_i32 : i32, i32
  }
  func.func @transform_1(%arg0: i32) -> (i32, i32) {
    %c0_i32 = arith.constant 0 : i32
    %c0_i32_0 = arith.constant 0 : i32
    %c0_i32_1 = arith.constant 0 : i32
    return %c0_i32, %c0_i32_0 : i32, i32
  }
  func.func @transform_2(%arg0: i32) -> (i32, i32) {
    %c0_i32 = arith.constant 0 : i32
    %c0_i32_0 = arith.constant 0 : i32
    return %arg0, %c0_i32 : i32, i32
  }
}

</mosaic_0001>

<llo_original>
// kernel: tpu_custom_call.1
$region0: #{tpu_custom_call.1}
  #allocation0 [shape = 'u32[]', space=smem, size = 0x4, offset = 0x4, fixed_abs, tag = 'smem constant byte address 0x4 - core index']
  #allocation1 [shape = 'u32[144,128]{1,0:T(1,128)}', space=vmem, size = 0x12000, scoped, tag = 'internal scratch']
  %s0 = inlined_call_operand.vmem [shape: s32[16,1], index: 0, kind: input, shape index: {}]
  %s1 = inlined_call_operand.vmem [shape: f32[128,48], index: 1, kind: input, shape index: {}]
  %s2 = inlined_call_operand.hbm [shape: f32[16,48], index: 2, kind: output, shape index: {}]
  %s3 = sld [smem:[#allocation0]]
  $region41: #{tpu_custom_call.1} parent=0
    _
  %s5 = ssub.s32 1, %s3
  %s6 = scalar_select 0, %s5, %s3
  $region1: #{tpu_custom_call.1} parent=0
    #allocation2 [shape = 'u8[8192]{0}', space=vmem, size = 0x2000, scoped, tag = 'output window, operand 0']
    #allocation3 [shape = 's32[2]{0}', space=sflag, size = 0x8, scoped, tag = 'scoped memory for tpu_custom_call.1']
    %7 = vsyncpa [#allocation3], 0
    %s8 = scalar_lea.sflag [#allocation3], 1
    %9 = vsyncpa %s8, 0
    loop: start=0, step=1, limit=4
    $region2: #{tpu_custom_call.1} parent=1 // loop_pre_header
      _
    $region3: #{tpu_custom_call.1} parent=1 // loop_header
      %s11 = sphi 0, %s15
      %p12 = scmp.ge.s32.totalorder %s11, 4
      %s21 = sphi 0, %s23
      %s24 = sphi 0, %s21
      %s25 = sphi 0, %s24
      %s41 = sphi 0, %s25
      %s45 = sphi 0, %s45
      %s47 = sphi 0, %s45
      %s48 = sphi 0, %s47
      %s62 = sphi 0, %s48
      %s68 = sphi 0, %s70
      %s71 = sphi 0, %s68
      %s72 = sphi 0, %s71
      %s88 = sphi 0, %s72
    $region4: #{tpu_custom_call.1} parent=1 // loop_header_branch
      %14 = sbr.rel (%p12) target = $region8
    $region5: #{tpu_custom_call.1} parent=1 // loop_body
      %s16 = ssub.s32 %s11, 1
      %s17 = ssub.s32 %s11, 2
      %s18 = sadd.s32 %s11, 1
      %s19 = ssub.s32 %s11, %s18
      %p20 = scmp.eq.s32.totalorder %s19, 0
      %s22 = sadd.s32 %s21, 1
      %s23 = scalar_select %p20, %s21, %s22
      %p26 = pneg %p20
      %p27 = scmp.eq.s32.totalorder %s11, 1
      %p28 = por %p26, %p27
      %p29 = scmp.ne.s32.totalorder %s21, %s24
      %p30 = scmp.eq.s32.totalorder %s11, 0
      %p31 = por %p29, %p30
      %p32 = scmp.ne.s32.totalorder %s21, %s24
      %p33 = scmp.eq.s32.totalorder %s16, 1
      %p34 = por %p32, %p33
      %p35 = scmp.ne.s32.totalorder %s24, %s25
      %p36 = scmp.eq.s32.totalorder %s16, 0
      %p37 = por %p35, %p36
      %p38 = scmp.ne.s32.totalorder %s24, %s25
      %p39 = scmp.eq.s32.totalorder %s17, 1
      %p40 = por %p38, %p39
      %p42 = scmp.ne.s32.totalorder %s25, %s41
      %p43 = scmp.eq.s32.totalorder %s17, 0
      %p44 = por %p42, %p43
      %s46 = sadd.s32 %s45, 1
      %p49 = scmp.eq.s32.totalorder %s11, 1
      %p50 = scmp.ne.s32.totalorder %s45, %s47
      %p51 = scmp.eq.s32.totalorder %s11, 0
      %p52 = por %p50, %p51
      %p53 = scmp.ne.s32.totalorder %s45, %s47
      %p54 = scmp.eq.s32.totalorder %s16, 1
      %p55 = por %p53, %p54
      %p56 = scmp.ne.s32.totalorder %s47, %s48
      %p57 = scmp.eq.s32.totalorder %s16, 0
      %p58 = por %p56, %p57
      %p59 = scmp.ne.s32.totalorder %s47, %s48
      %p60 = scmp.eq.s32.totalorder %s17, 1
      %p61 = por %p59, %p60
      %p63 = scmp.ne.s32.totalorder %s48, %s62
      %p64 = scmp.eq.s32.totalorder %s17, 0
      %p65 = por %p63, %p64
      %s66 = ssub.s32 %s11, %s18
      %p67 = scmp.eq.s32.totalorder %s66, 0
      %s69 = sadd.s32 %s68, 1
      %s70 = scalar_select %p67, %s68, %s69
      %p73 = pneg %p67
      %p74 = scmp.eq.s32.totalorder %s11, 1
      %p75 = por %p73, %p74
      %p76 = scmp.ne.s32.totalorder %s68, %s71
      %p77 = scmp.eq.s32.totalorder %s11, 0
      %p78 = por %p76, %p77
      %p79 = scmp.ne.s32.totalorder %s68, %s71
      %p80 = scmp.eq.s32.totalorder %s16, 1
      %p81 = por %p79, %p80
      %p82 = scmp.ne.s32.totalorder %s71, %s72
      %p83 = scmp.eq.s32.totalorder %s16, 0
      %p84 = por %p82, %p83
      %p85 = scmp.ne.s32.totalorder %s71, %s72
      %p86 = scmp.eq.s32.totalorder %s17, 1
      %p87 = por %p85, %p86
      %p89 = scmp.ne.s32.totalorder %s72, %s88
      %p90 = scmp.eq.s32.totalorder %s17, 0
      %p91 = por %p89, %p90
      %p92 = scmp.le.s32.totalorder 1, %s11
      %p93 = scmp.lt.s32.totalorder %s11, 3
      %p94 = pnand %p92, %p93
      %p95 = pneg %p94
      // Predicated region
      $region9: #{tpu_custom_call.1} parent=5 // pred_check
        _
      $region10: #{tpu_custom_call.1} parent=5 // pred_check_branch
        %97 = sbr.rel (%p94) target = $region12
      $region11: #{tpu_custom_call.1} parent=5 // pred_region
        %s98 = ssub.s32 %s11, 1
        // Predicated region
        $region13: #{tpu_custom_call.1} parent=11 // pred_check
          %p99 = pneg %p58
        $region14: #{tpu_custom_call.1} parent=11 // pred_check_branch
          %101 = sbr.rel (%p99) target = $region16
        $region15: #{tpu_custom_call.1} parent=11 // pred_region
          _
        $region16: #{tpu_custom_call.1} parent=11 // pred_fallthru
          _
      $region12: #{tpu_custom_call.1} parent=5 // pred_fallthru
        _
      %p102 = scmp.lt.s32.totalorder %s11, 2
      // Predicated region
      $region17: #{tpu_custom_call.1} parent=5 // pred_check
        %p103 = pneg %p102
      $region18: #{tpu_custom_call.1} parent=5 // pred_check_branch
        %105 = sbr.rel (%p103) target = $region20
      $region19: #{tpu_custom_call.1} parent=5 // pred_region
        // Predicated region
        $region21: #{tpu_custom_call.1} parent=19 // pred_check
          %p106 = pneg %p31
        $region22: #{tpu_custom_call.1} parent=19 // pred_check_branch
          %108 = sbr.rel (%p106) target = $region24
        $region23: #{tpu_custom_call.1} parent=19 // pred_region
          %p109 = scmp.lt.s32.totalorder %s11, 1
          %s110 = scalar_select %p109, %s11, 1
          %s111 = smul.addr %s110, 8
          %s112 = scalar_lea.vmem %s0, %s111
        $region24: #{tpu_custom_call.1} parent=19 // pred_fallthru
          _
      $region20: #{tpu_custom_call.1} parent=5 // pred_fallthru
        _
      %p113 = scmp.le.s32.totalorder 1, %s11
      %p114 = scmp.lt.s32.totalorder %s11, 3
      %p115 = pnand %p113, %p114
      %p116 = pneg %p115
      // Predicated region
      $region25: #{tpu_custom_call.1} parent=5 // pred_check
        _
      $region26: #{tpu_custom_call.1} parent=5 // pred_check_branch
        %118 = sbr.rel (%p115) target = $region28
      $region27: #{tpu_custom_call.1} parent=5 // pred_region
        %s119 = ssub.s32 %s11, 1
        %p120 = scmp.lt.s32.totalorder %s16, 1
        %s121 = scalar_select %p120, %s16, 1
        %s122 = smul.addr %s121, 8
        %s123 = scalar_lea.vmem %s0, %s122
        %p124 = pneg %p37
        %p125 = pneg %p34
        %p126 = pneg %p58
        %p127 = pneg %p55
        %p128 = pneg %p84
        %p129 = pneg %p81
        %s130 = sand.u32 %s71, 1
        %s131 = scalar_lea.sflag [#allocation3], %s130
        %s132 = sand.u32 %s71, 1
        %s133 = smul.addr %s132, 8
        %s134 = scalar_lea.vmem [#allocation2], %s133
        %p135 = scmp.lt.s32.totalorder %s16, 1
        %s136 = scalar_select %p135, %s16, 1
        %s137 = smul.addr %s136, 8
        %s138 = scalar_lea.vmem %s0, %s137
        %v139 = vld [vmem:[%s138] sm:$0xff]
        %v140 = vlaneseq
        %v141 = vand.u32 %v140, 127
        %142 = vset.pattern.permute.xlu0 0
        %143 = vperm.xlu0 %142, %v139
        %v144 = vpop.permute.xlu0 %143
        %vm145 = vcmp.eq.s32.totalorder %v141, %v144
        %v146 = vsel %vm145, 1, 0
        %v147 = vcvt.s32.f32 %v146
        %v148 = vld [vmem:[%s1] sm:$0xff]
        %v149 = vld [vmem:[%s1 + $0x8] sm:$0xff]
        %v150 = vld [vmem:[%s1 + $0x10] sm:$0xff]
        %v151 = vld [vmem:[%s1 + $0x18] sm:$0xff]
        %v152 = vld [vmem:[%s1 + $0x20] sm:$0xff]
        %v153 = vld [vmem:[%s1 + $0x28] sm:$0xff]
        %v154 = vld [vmem:[%s1 + $0x30] sm:$0xff]
        %v155 = vld [vmem:[%s1 + $0x38] sm:$0xff]
        %v156 = vld [vmem:[%s1 + $0x40] sm:$0xff]
        %v157 = vld [vmem:[%s1 + $0x48] sm:$0xff]
        %v158 = vld [vmem:[%s1 + $0x50] sm:$0xff]
        %v159 = vld [vmem:[%s1 + $0x58] sm:$0xff]
        %v160 = vld [vmem:[%s1 + $0x60] sm:$0xff]
        %v161 = vld [vmem:[%s1 + $0x68] sm:$0xff]
        %v162 = vld [vmem:[%s1 + $0x70] sm:$0xff]
        %v163 = vld [vmem:[%s1 + $0x78] sm:$0xff]
        %164 = vmatprep.subr.mxu0 0.0
        %v165 = vand.u32 %v148, 4294901760
        %166 = vmatpush1.msra.mxu0 %v165
        %167 = vmatprep.subr.mxu0 0.0
        %v168 = vand.u32 %v149, 4294901760
        %169 = vmatpush1.msra.mxu0 %v168
        %170 = vmatprep.subr.mxu0 0.0
        %v171 = vand.u32 %v150, 4294901760
        %172 = vmatpush1.msra.mxu0 %v171
        %173 = vmatprep.subr.mxu0 0.0
        %v174 = vand.u32 %v151, 4294901760
        %175 = vmatpush1.msra.mxu0 %v174
        %176 = vmatprep.subr.mxu0 0.0
        %v177 = vand.u32 %v152, 4294901760
        %178 = vmatpush1.msra.mxu0 %v177
        %179 = vmatprep.subr.mxu0 0.0
        %v180 = vand.u32 %v153, 4294901760
        %181 = vmatpush1.msra.mxu0 %v180
        %182 = vmatprep.subr.mxu0 0.0
        %v183 = vand.u32 %v154, 4294901760
        %184 = vmatpush1.msra.mxu0 %v183
        %185 = vmatprep.subr.mxu0 0.0
        %v186 = vand.u32 %v155, 4294901760
        %187 = vmatpush1.msra.mxu0 %v186
        %188 = vmatprep.subr.mxu0 0.0
        %v189 = vand.u32 %v156, 4294901760
        %190 = vmatpush1.msra.mxu0 %v189
        %191 = vmatprep.subr.mxu0 0.0
        %v192 = vand.u32 %v157, 4294901760
        %193 = vmatpush1.msra.mxu0 %v192
        %194 = vmatprep.subr.mxu0 0.0
        %v195 = vand.u32 %v158, 4294901760
        %196 = vmatpush1.msra.mxu0 %v195
        %197 = vmatprep.subr.mxu0 0.0
        %v198 = vand.u32 %v159, 4294901760
        %199 = vmatpush1.msra.mxu0 %v198
        %200 = vmatprep.subr.mxu0 0.0
        %v201 = vand.u32 %v160, 4294901760
        %202 = vmatpush1.msra.mxu0 %v201
        %203 = vmatprep.subr.mxu0 0.0
        %v204 = vand.u32 %v161, 4294901760
        %205 = vmatpush1.msra.mxu0 %v204
        %206 = vmatprep.subr.mxu0 0.0
        %v207 = vand.u32 %v162, 4294901760
        %208 = vmatpush1.msra.mxu0 %v207
        %209 = vmatprep.subr.mxu0 0.0
        %v210 = vand.u32 %v163, 4294901760
        %211 = vmatpush1.msra.mxu0 %v210
        %212 = vmatprep.subr.mxu0 0.0
        %213 = vmatpush1.msra.mxu0 0.0
        %214 = vmatprep.subr.mxu0 0.0
        %215 = vmatpush1.msra.mxu0 0.0
        %216 = vmatprep.subr.mxu0 0.0
        %217 = vmatpush1.msra.mxu0 0.0
        %218 = vmatprep.subr.mxu0 0.0
        %219 = vmatpush1.msra.mxu0 0.0
        %220 = vmatprep.subr.mxu0 0.0
        %221 = vmatpush1.msra.mxu0 0.0
        %222 = vmatprep.subr.mxu0 0.0
        %223 = vmatpush1.msra.mxu0 0.0
        %224 = vmatprep.subr.mxu0 0.0
        %225 = vmatpush1.msra.mxu0 0.0
        %226 = vmatprep.subr.mxu0 0.0
        %227 = vmatpush1.msra.mxu0 0.0
        %228 = vmatprep.subr.mxu0 0.0
        %229 = vmatpush1.msra.mxu0 0.0
        %230 = vmatprep.subr.mxu0 0.0
        %231 = vmatpush1.msra.mxu0 0.0
        %232 = vmatprep.subr.mxu0 0.0
        %233 = vmatpush1.msra.mxu0 0.0
        %234 = vmatprep.subr.mxu0 0.0
        %235 = vmatpush1.msra.mxu0 0.0
        %236 = vmatprep.subr.mxu0 0.0
        %237 = vmatpush1.msra.mxu0 0.0
        %238 = vmatprep.subr.mxu0 0.0
        %239 = vmatpush1.msra.mxu0 0.0
        %240 = vmatprep.subr.mxu0 0.0
        %241 = vmatpush1.msra.mxu0 0.0
        %242 = vmatprep.subr.mxu0 0.0
        %243 = vmatpush1.msra.mxu0 0.0
        %244 = vmatprep.mubr.f32.mxu0 0.0
        %v245 = vand.u32 %v147, 4294901760
        %v246 = vsub.f32 %v147, %v245
        %v247 = vand.u32 %v246, 4294901760
        %v248 = vsub.f32 %v246, %v247
        %v249 = vand.u32 %v248, 4294901760
        %250 = vmatmul.mubr.f32.gmra.mrb[0].mxu0 %v249
        %v251 = vpop.f32.mrb[0].mxu0
        %v252 = vadd.f32 0.0, %v251
        %v253 = vpop.f32.mrb[0].mxu0
        %254 = vdwg.mxu0
        %255 = vmatprep.subr.mxu0 0.0
        %v256 = vand.u32 %v148, 4294901760
        %v257 = vsub.f32 %v148, %v256
        %v258 = vand.u32 %v257, 4294901760
        %v259 = vsub.f32 %v257, %v258
        %v260 = vand.u32 %v259, 4294901760
        %261 = vmatpush1.msra.mxu0 %v260
        %262 = vmatprep.subr.mxu0 0.0
        %v263 = vand.u32 %v149, 4294901760
        %v264 = vsub.f32 %v149, %v263
        %v265 = vand.u32 %v264, 4294901760
        %v266 = vsub.f32 %v264, %v265
        %v267 = vand.u32 %v266, 4294901760
        %268 = vmatpush1.msra.mxu0 %v267
        %269 = vmatprep.subr.mxu0 0.0
        %v270 = vand.u32 %v150, 4294901760
        %v271 = vsub.f32 %v150, %v270
        %v272 = vand.u32 %v271, 4294901760
        %v273 = vsub.f32 %v271, %v272
        %v274 = vand.u32 %v273, 4294901760
        %275 = vmatpush1.msra.mxu0 %v274
        %276 = vmatprep.subr.mxu0 0.0
        %v277 = vand.u32 %v151, 4294901760
        %v278 = vsub.f32 %v151, %v277
        %v279 = vand.u32 %v278, 4294901760
        %v280 = vsub.f32 %v278, %v279
        %v281 = vand.u32 %v280, 4294901760
        %282 = vmatpush1.msra.mxu0 %v281
        %283 = vmatprep.subr.mxu0 0.0
        %v284 = vand.u32 %v152, 4294901760
        %v285 = vsub.f32 %v152, %v284
        %v286 = vand.u32 %v285, 4294901760
        %v287 = vsub.f32 %v285, %v286
        %v288 = vand.u32 %v287, 4294901760
        %289 = vmatpush1.msra.mxu0 %v288
        %290 = vmatprep.subr.mxu0 0.0
        %v291 = vand.u32 %v153, 4294901760
        %v292 = vsub.f32 %v153, %v291
        %v293 = vand.u32 %v292, 4294901760
        %v294 = vsub.f32 %v292, %v293
        %v295 = vand.u32 %v294, 4294901760
        %296 = vmatpush1.msra.mxu0 %v295
        %297 = vmatprep.subr.mxu0 0.0
        %v298 = vand.u32 %v154, 4294901760
        %v299 = vsub.f32 %v154, %v298
        %v300 = vand.u32 %v299, 4294901760
        %v301 = vsub.f32 %v299, %v300
        %v302 = vand.u32 %v301, 4294901760
        %303 = vmatpush1.msra.mxu0 %v302
        %304 = vmatprep.subr.mxu0 0.0
        %v305 = vand.u32 %v155, 4294901760
        %v306 = vsub.f32 %v155, %v305
        %v307 = vand.u32 %v306, 4294901760
        %v308 = vsub.f32 %v306, %v307
        %v309 = vand.u32 %v308, 4294901760
        %310 = vmatpush1.msra.mxu0 %v309
        %311 = vmatprep.subr.mxu0 0.0
        %v312 = vand.u32 %v156, 4294901760
        %v313 = vsub.f32 %v156, %v312
        %v314 = vand.u32 %v313, 4294901760
        %v315 = vsub.f32 %v313, %v314
        %v316 = vand.u32 %v315, 4294901760
        %317 = vmatpush1.msra.mxu0 %v316
        %318 = vmatprep.subr.mxu0 0.0
        %v319 = vand.u32 %v157, 4294901760
        %v320 = vsub.f32 %v157, %v319
        %v321 = vand.u32 %v320, 4294901760
        %v322 = vsub.f32 %v320, %v321
        %v323 = vand.u32 %v322, 4294901760
        %324 = vmatpush1.msra.mxu0 %v323
        %325 = vmatprep.subr.mxu0 0.0
        %v326 = vand.u32 %v158, 4294901760
        %v327 = vsub.f32 %v158, %v326
        %v328 = vand.u32 %v327, 4294901760
        %v329 = vsub.f32 %v327, %v328
        %v330 = vand.u32 %v329, 4294901760
        %331 = vmatpush1.msra.mxu0 %v330
        %332 = vmatprep.subr.mxu0 0.0
        %v333 = vand.u32 %v159, 4294901760
        %v334 = vsub.f32 %v159, %v333
        %v335 = vand.u32 %v334, 4294901760
        %v336 = vsub.f32 %v334, %v335
        %v337 = vand.u32 %v336, 4294901760
        %338 = vmatpush1.msra.mxu0 %v337
        %339 = vmatprep.subr.mxu0 0.0
        %v340 = vand.u32 %v160, 4294901760
        %v341 = vsub.f32 %v160, %v340
        %v342 = vand.u32 %v341, 4294901760
        %v343 = vsub.f32 %v341, %v342
        %v344 = vand.u32 %v343, 4294901760
        %345 = vmatpush1.msra.mxu0 %v344
        %346 = vmatprep.subr.mxu0 0.0
        %v347 = vand.u32 %v161, 4294901760
        %v348 = vsub.f32 %v161, %v347
        %v349 = vand.u32 %v348, 4294901760
        %v350 = vsub.f32 %v348, %v349
        %v351 = vand.u32 %v350, 4294901760
        %352 = vmatpush1.msra.mxu0 %v351
        %353 = vmatprep.subr.mxu0 0.0
        %v354 = vand.u32 %v162, 4294901760
        %v355 = vsub.f32 %v162, %v354
        %v356 = vand.u32 %v355, 4294901760
        %v357 = vsub.f32 %v355, %v356
        %v358 = vand.u32 %v357, 4294901760
        %359 = vmatpush1.msra.mxu0 %v358
        %360 = vmatprep.subr.mxu0 0.0
        %v361 = vand.u32 %v163, 4294901760
        %v362 = vsub.f32 %v163, %v361
        %v363 = vand.u32 %v362, 4294901760
        %v364 = vsub.f32 %v362, %v363
        %v365 = vand.u32 %v364, 4294901760
        %366 = vmatpush1.msra.mxu0 %v365
        %367 = vmatprep.subr.mxu0 0.0
        %368 = vmatpush1.msra.mxu0 0.0
        %369 = vmatprep.subr.mxu0 0.0
        %370 = vmatpush1.msra.mxu0 0.0
        %371 = vmatprep.subr.mxu0 0.0
        %372 = vmatpush1.msra.mxu0 0.0
        %373 = vmatprep.subr.mxu0 0.0
        %374 = vmatpush1.msra.mxu0 0.0
        %375 = vmatprep.subr.mxu0 0.0
        %376 = vmatpush1.msra.mxu0 0.0
        %377 = vmatprep.subr.mxu0 0.0
        %378 = vmatpush1.msra.mxu0 0.0
        %379 = vmatprep.subr.mxu0 0.0
        %380 = vmatpush1.msra.mxu0 0.0
        %381 = vmatprep.subr.mxu0 0.0
        %382 = vmatpush1.msra.mxu0 0.0
        %383 = vmatprep.subr.mxu0 0.0
        %384 = vmatpush1.msra.mxu0 0.0
        %385 = vmatprep.subr.mxu0 0.0
        %386 = vmatpush1.msra.mxu0 0.0
        %387 = vmatprep.subr.mxu0 0.0
        %388 = vmatpush1.msra.mxu0 0.0
        %389 = vmatprep.subr.mxu0 0.0
        %390 = vmatpush1.msra.mxu0 0.0
        %391 = vmatprep.subr.mxu0 0.0
        %392 = vmatpush1.msra.mxu0 0.0
        %393 = vmatprep.subr.mxu0 0.0
        %394 = vmatpush1.msra.mxu0 0.0
        %395 = vmatprep.subr.mxu0 0.0
        %396 = vmatpush1.msra.mxu0 0.0
        %397 = vmatprep.subr.mxu0 0.0
        %398 = vmatpush1.msra.mxu0 0.0
        %399 = vmatprep.mubr.f32.mxu0 0.0
        %v400 = vand.u32 %v147, 4294901760
        %401 = vmatmul.mubr.f32.gmra.mrb[0].mxu0 %v400
        %v402 = vpop.f32.mrb[0].mxu0
        %v403 = vadd.f32 %v252, %v402
        %v404 = vpop.f32.mrb[0].mxu0
        %405 = vdwg.mxu0
        %406 = vmatprep.subr.mxu0 0.0
        %v407 = vand.u32 %v148, 4294901760
        %v408 = vsub.f32 %v148, %v407
        %409 = vmatpush1.msra.mxu0 %v408
        %410 = vmatprep.subr.mxu0 0.0
        %v411 = vand.u32 %v149, 4294901760
        %v412 = vsub.f32 %v149, %v411
        %413 = vmatpush1.msra.mxu0 %v412
        %414 = vmatprep.subr.mxu0 0.0
        %v415 = vand.u32 %v150, 4294901760
        %v416 = vsub.f32 %v150, %v415
        %417 = vmatpush1.msra.mxu0 %v416
        %418 = vmatprep.subr.mxu0 0.0
        %v419 = vand.u32 %v151, 4294901760
        %v420 = vsub.f32 %v151, %v419
        %421 = vmatpush1.msra.mxu0 %v420
        %422 = vmatprep.subr.mxu0 0.0
        %v423 = vand.u32 %v152, 4294901760
        %v424 = vsub.f32 %v152, %v423
        %425 = vmatpush1.msra.mxu0 %v424
        %426 = vmatprep.subr.mxu0 0.0
        %v427 = vand.u32 %v153, 4294901760
        %v428 = vsub.f32 %v153, %v427
        %429 = vmatpush1.msra.mxu0 %v428
        %430 = vmatprep.subr.mxu0 0.0
        %v431 = vand.u32 %v154, 4294901760
        %v432 = vsub.f32 %v154, %v431
        %433 = vmatpush1.msra.mxu0 %v432
        %434 = vmatprep.subr.mxu0 0.0
        %v435 = vand.u32 %v155, 4294901760
        %v436 = vsub.f32 %v155, %v435
        %437 = vmatpush1.msra.mxu0 %v436
        %438 = vmatprep.subr.mxu0 0.0
        %v439 = vand.u32 %v156, 4294901760
        %v440 = vsub.f32 %v156, %v439
        %441 = vmatpush1.msra.mxu0 %v440
        %442 = vmatprep.subr.mxu0 0.0
        %v443 = vand.u32 %v157, 4294901760
        %v444 = vsub.f32 %v157, %v443
        %445 = vmatpush1.msra.mxu0 %v444
        %446 = vmatprep.subr.mxu0 0.0
        %v447 = vand.u32 %v158, 4294901760
        %v448 = vsub.f32 %v158, %v447
        %449 = vmatpush1.msra.mxu0 %v448
        %450 = vmatprep.subr.mxu0 0.0
        %v451 = vand.u32 %v159, 4294901760
        %v452 = vsub.f32 %v159, %v451
        %453 = vmatpush1.msra.mxu0 %v452
        %454 = vmatprep.subr.mxu0 0.0
        %v455 = vand.u32 %v160, 4294901760
        %v456 = vsub.f32 %v160, %v455
        %457 = vmatpush1.msra.mxu0 %v456
        %458 = vmatprep.subr.mxu0 0.0
        %v459 = vand.u32 %v161, 4294901760
        %v460 = vsub.f32 %v161, %v459
        %461 = vmatpush1.msra.mxu0 %v460
        %462 = vmatprep.subr.mxu0 0.0
        %v463 = vand.u32 %v162, 4294901760
        %v464 = vsub.f32 %v162, %v463
        %465 = vmatpush1.msra.mxu0 %v464
        %466 = vmatprep.subr.mxu0 0.0
        %v467 = vand.u32 %v163, 4294901760
        %v468 = vsub.f32 %v163, %v467
        %469 = vmatpush1.msra.mxu0 %v468
        %470 = vmatprep.subr.mxu0 0.0
        %471 = vmatpush1.msra.mxu0 0.0
        %472 = vmatprep.subr.mxu0 0.0
        %473 = vmatpush1.msra.mxu0 0.0
        %474 = vmatprep.subr.mxu0 0.0
        %475 = vmatpush1.msra.mxu0 0.0
        %476 = vmatprep.subr.mxu0 0.0
        %477 = vmatpush1.msra.mxu0 0.0
        %478 = vmatprep.subr.mxu0 0.0
        %479 = vmatpush1.msra.mxu0 0.0
        %480 = vmatprep.subr.mxu0 0.0
        %481 = vmatpush1.msra.mxu0 0.0
        %482 = vmatprep.subr.mxu0 0.0
        %483 = vmatpush1.msra.mxu0 0.0
        %484 = vmatprep.subr.mxu0 0.0
        %485 = vmatpush1.msra.mxu0 0.0
        %486 = vmatprep.subr.mxu0 0.0
        %487 = vmatpush1.msra.mxu0 0.0
        %488 = vmatprep.subr.mxu0 0.0
        %489 = vmatpush1.msra.mxu0 0.0
        %490 = vmatprep.subr.mxu0 0.0
        %491 = vmatpush1.msra.mxu0 0.0
        %492 = vmatprep.subr.mxu0 0.0
        %493 = vmatpush1.msra.mxu0 0.0
        %494 = vmatprep.subr.mxu0 0.0
        %495 = vmatpush1.msra.mxu0 0.0
        %496 = vmatprep.subr.mxu0 0.0
        %497 = vmatpush1.msra.mxu0 0.0
        %498 = vmatprep.subr.mxu0 0.0
        %499 = vmatpush1.msra.mxu0 0.0
        %500 = vmatprep.subr.mxu0 0.0
        %501 = vmatpush1.msra.mxu0 0.0
        %502 = vmatprep.mubr.f32.mxu0 0.0
        %v503 = vand.u32 %v147, 4294901760
        %v504 = vsub.f32 %v147, %v503
        %505 = vmatmul.mubr.f32.gmra.mrb[0].mxu0 %v504
        %v506 = vpop.f32.mrb[0].mxu0
        %v507 = vadd.f32 %v403, %v506
        %v508 = vpop.f32.mrb[0].mxu0
        %509 = vdwg.mxu0
        %510 = vmatprep.subr.mxu0 0.0
        %v511 = vand.u32 %v148, 4294901760
        %512 = vmatpush1.msra.mxu0 %v511
        %513 = vmatprep.subr.mxu0 0.0
        %v514 = vand.u32 %v149, 4294901760
        %515 = vmatpush1.msra.mxu0 %v514
        %516 = vmatprep.subr.mxu0 0.0
        %v517 = vand.u32 %v150, 4294901760
        %518 = vmatpush1.msra.mxu0 %v517
        %519 = vmatprep.subr.mxu0 0.0
        %v520 = vand.u32 %v151, 4294901760
        %521 = vmatpush1.msra.mxu0 %v520
        %522 = vmatprep.subr.mxu0 0.0
        %v523 = vand.u32 %v152, 4294901760
        %524 = vmatpush1.msra.mxu0 %v523
        %525 = vmatprep.subr.mxu0 0.0
        %v526 = vand.u32 %v153, 4294901760
        %527 = vmatpush1.msra.mxu0 %v526
        %528 = vmatprep.subr.mxu0 0.0
        %v529 = vand.u32 %v154, 4294901760
        %530 = vmatpush1.msra.mxu0 %v529
        %531 = vmatprep.subr.mxu0 0.0
        %v532 = vand.u32 %v155, 4294901760
        %533 = vmatpush1.msra.mxu0 %v532
        %534 = vmatprep.subr.mxu0 0.0
        %v535 = vand.u32 %v156, 4294901760
        %536 = vmatpush1.msra.mxu0 %v535
        %537 = vmatprep.subr.mxu0 0.0
        %v538 = vand.u32 %v157, 4294901760
        %539 = vmatpush1.msra.mxu0 %v538
        %540 = vmatprep.subr.mxu0 0.0
        %v541 = vand.u32 %v158, 4294901760
        %542 = vmatpush1.msra.mxu0 %v541
        %543 = vmatprep.subr.mxu0 0.0
        %v544 = vand.u32 %v159, 4294901760
        %545 = vmatpush1.msra.mxu0 %v544
        %546 = vmatprep.subr.mxu0 0.0
        %v547 = vand.u32 %v160, 4294901760
        %548 = vmatpush1.msra.mxu0 %v547
        %549 = vmatprep.subr.mxu0 0.0
        %v550 = vand.u32 %v161, 4294901760
        %551 = vmatpush1.msra.mxu0 %v550
        %552 = vmatprep.subr.mxu0 0.0
        %v553 = vand.u32 %v162, 4294901760
        %554 = vmatpush1.msra.mxu0 %v553
        %555 = vmatprep.subr.mxu0 0.0
        %v556 = vand.u32 %v163, 4294901760
        %557 = vmatpush1.msra.mxu0 %v556
        %558 = vmatprep.subr.mxu0 0.0
        %559 = vmatpush1.msra.mxu0 0.0
        %560 = vmatprep.subr.mxu0 0.0
        %561 = vmatpush1.msra.mxu0 0.0
        %562 = vmatprep.subr.mxu0 0.0
        %563 = vmatpush1.msra.mxu0 0.0
        %564 = vmatprep.subr.mxu0 0.0
        %565 = vmatpush1.msra.mxu0 0.0
        %566 = vmatprep.subr.mxu0 0.0
        %567 = vmatpush1.msra.mxu0 0.0
        %568 = vmatprep.subr.mxu0 0.0
        %569 = vmatpush1.msra.mxu0 0.0
        %570 = vmatprep.subr.mxu0 0.0
        %571 = vmatpush1.msra.mxu0 0.0
        %572 = vmatprep.subr.mxu0 0.0
        %573 = vmatpush1.msra.mxu0 0.0
        %574 = vmatprep.subr.mxu0 0.0
        %575 = vmatpush1.msra.mxu0 0.0
        %576 = vmatprep.subr.mxu0 0.0
        %577 = vmatpush1.msra.mxu0 0.0
        %578 = vmatprep.subr.mxu0 0.0
        %579 = vmatpush1.msra.mxu0 0.0
        %580 = vmatprep.subr.mxu0 0.0
        %581 = vmatpush1.msra.mxu0 0.0
        %582 = vmatprep.subr.mxu0 0.0
        %583 = vmatpush1.msra.mxu0 0.0
        %584 = vmatprep.subr.mxu0 0.0
        %585 = vmatpush1.msra.mxu0 0.0
        %586 = vmatprep.subr.mxu0 0.0
        %587 = vmatpush1.msra.mxu0 0.0
        %588 = vmatprep.subr.mxu0 0.0
        %589 = vmatpush1.msra.mxu0 0.0
        %590 = vmatprep.mubr.f32.mxu0 0.0
        %v591 = vand.u32 %v147, 4294901760
        %v592 = vsub.f32 %v147, %v591
        %v593 = vand.u32 %v592, 4294901760
        %594 = vmatmul.mubr.f32.gmra.mrb[0].mxu0 %v593
        %v595 = vpop.f32.mrb[0].mxu0
        %v596 = vadd.f32 %v507, %v595
        %v597 = vpop.f32.mrb[0].mxu0
        %598 = vdwg.mxu0
        %599 = vmatprep.subr.mxu0 0.0
        %v600 = vand.u32 %v148, 4294901760
        %v601 = vsub.f32 %v148, %v600
        %v602 = vand.u32 %v601, 4294901760
        %603 = vmatpush1.msra.mxu0 %v602
        %604 = vmatprep.subr.mxu0 0.0
        %v605 = vand.u32 %v149, 4294901760
        %v606 = vsub.f32 %v149, %v605
        %v607 = vand.u32 %v606, 4294901760
        %608 = vmatpush1.msra.mxu0 %v607
        %609 = vmatprep.subr.mxu0 0.0
        %v610 = vand.u32 %v150, 4294901760
        %v611 = vsub.f32 %v150, %v610
        %v612 = vand.u32 %v611, 4294901760
        %613 = vmatpush1.msra.mxu0 %v612
        %614 = vmatprep.subr.mxu0 0.0
        %v615 = vand.u32 %v151, 4294901760
        %v616 = vsub.f32 %v151, %v615
        %v617 = vand.u32 %v616, 4294901760
        %618 = vmatpush1.msra.mxu0 %v617
        %619 = vmatprep.subr.mxu0 0.0
        %v620 = vand.u32 %v152, 4294901760
        %v621 = vsub.f32 %v152, %v620
        %v622 = vand.u32 %v621, 4294901760
        %623 = vmatpush1.msra.mxu0 %v622
        %624 = vmatprep.subr.mxu0 0.0
        %v625 = vand.u32 %v153, 4294901760
        %v626 = vsub.f32 %v153, %v625
        %v627 = vand.u32 %v626, 4294901760
        %628 = vmatpush1.msra.mxu0 %v627
        %629 = vmatprep.subr.mxu0 0.0
        %v630 = vand.u32 %v154, 4294901760
        %v631 = vsub.f32 %v154, %v630
        %v632 = vand.u32 %v631, 4294901760
        %633 = vmatpush1.msra.mxu0 %v632
        %634 = vmatprep.subr.mxu0 0.0
        %v635 = vand.u32 %v155, 4294901760
        %v636 = vsub.f32 %v155, %v635
        %v637 = vand.u32 %v636, 4294901760
        %638 = vmatpush1.msra.mxu0 %v637
        %639 = vmatprep.subr.mxu0 0.0
        %v640 = vand.u32 %v156, 4294901760
        %v641 = vsub.f32 %v156, %v640
        %v642 = vand.u32 %v641, 4294901760
        %643 = vmatpush1.msra.mxu0 %v642
        %644 = vmatprep.subr.mxu0 0.0
        %v645 = vand.u32 %v157, 4294901760
        %v646 = vsub.f32 %v157, %v645
        %v647 = vand.u32 %v646, 4294901760
        %648 = vmatpush1.msra.mxu0 %v647
        %649 = vmatprep.subr.mxu0 0.0
        %v650 = vand.u32 %v158, 4294901760
        %v651 = vsub.f32 %v158, %v650
        %v652 = vand.u32 %v651, 4294901760
        %653 = vmatpush1.msra.mxu0 %v652
        %654 = vmatprep.subr.mxu0 0.0
        %v655 = vand.u32 %v159, 4294901760
        %v656 = vsub.f32 %v159, %v655
        %v657 = vand.u32 %v656, 4294901760
        %658 = vmatpush1.msra.mxu0 %v657
        %659 = vmatprep.subr.mxu0 0.0
        %v660 = vand.u32 %v160, 4294901760
        %v661 = vsub.f32 %v160, %v660
        %v662 = vand.u32 %v661, 4294901760
        %663 = vmatpush1.msra.mxu0 %v662
        %664 = vmatprep.subr.mxu0 0.0
        %v665 = vand.u32 %v161, 4294901760
        %v666 = vsub.f32 %v161, %v665
        %v667 = vand.u32 %v666, 4294901760
        %668 = vmatpush1.msra.mxu0 %v667
        %669 = vmatprep.subr.mxu0 0.0
        %v670 = vand.u32 %v162, 4294901760
        %v671 = vsub.f32 %v162, %v670
        %v672 = vand.u32 %v671, 4294901760
        %673 = vmatpush1.msra.mxu0 %v672
        %674 = vmatprep.subr.mxu0 0.0
        %v675 = vand.u32 %v163, 4294901760
        %v676 = vsub.f32 %v163, %v675
        %v677 = vand.u32 %v676, 4294901760
        %678 = vmatpush1.msra.mxu0 %v677
        %679 = vmatprep.subr.mxu0 0.0
        %680 = vmatpush1.msra.mxu0 0.0
        %681 = vmatprep.subr.mxu0 0.0
        %682 = vmatpush1.msra.mxu0 0.0
        %683 = vmatprep.subr.mxu0 0.0
        %684 = vmatpush1.msra.mxu0 0.0
        %685 = vmatprep.subr.mxu0 0.0
        %686 = vmatpush1.msra.mxu0 0.0
        %687 = vmatprep.subr.mxu0 0.0
        %688 = vmatpush1.msra.mxu0 0.0
        %689 = vmatprep.subr.mxu0 0.0
        %690 = vmatpush1.msra.mxu0 0.0
        %691 = vmatprep.subr.mxu0 0.0
        %692 = vmatpush1.msra.mxu0 0.0
        %693 = vmatprep.subr.mxu0 0.0
        %694 = vmatpush1.msra.mxu0 0.0
        %695 = vmatprep.subr.mxu0 0.0
        %696 = vmatpush1.msra.mxu0 0.0
        %697 = vmatprep.subr.mxu0 0.0
        %698 = vmatpush1.msra.mxu0 0.0
        %699 = vmatprep.subr.mxu0 0.0
        %700 = vmatpush1.msra.mxu0 0.0
        %701 = vmatprep.subr.mxu0 0.0
        %702 = vmatpush1.msra.mxu0 0.0
        %703 = vmatprep.subr.mxu0 0.0
        %704 = vmatpush1.msra.mxu0 0.0
        %705 = vmatprep.subr.mxu0 0.0
        %706 = vmatpush1.msra.mxu0 0.0
        %707 = vmatprep.subr.mxu0 0.0
        %708 = vmatpush1.msra.mxu0 0.0
        %709 = vmatprep.subr.mxu0 0.0
        %710 = vmatpush1.msra.mxu0 0.0
        %711 = vmatprep.mubr.f32.mxu0 0.0
        %v712 = vand.u32 %v147, 4294901760
        %713 = vmatmul.mubr.f32.gmra.mrb[0].mxu0 %v712
        %v714 = vpop.f32.mrb[0].mxu0
        %v715 = vadd.f32 %v596, %v714
        %v716 = vpop.f32.mrb[0].mxu0
        %717 = vdwg.mxu0
        %718 = vmatprep.subr.mxu0 0.0
        %v719 = vand.u32 %v148, 4294901760
        %720 = vmatpush1.msra.mxu0 %v719
        %721 = vmatprep.subr.mxu0 0.0
        %v722 = vand.u32 %v149, 4294901760
        %723 = vmatpush1.msra.mxu0 %v722
        %724 = vmatprep.subr.mxu0 0.0
        %v725 = vand.u32 %v150, 4294901760
        %726 = vmatpush1.msra.mxu0 %v725
        %727 = vmatprep.subr.mxu0 0.0
        %v728 = vand.u32 %v151, 4294901760
        %729 = vmatpush1.msra.mxu0 %v728
        %730 = vmatprep.subr.mxu0 0.0
        %v731 = vand.u32 %v152, 4294901760
        %732 = vmatpush1.msra.mxu0 %v731
        %733 = vmatprep.subr.mxu0 0.0
        %v734 = vand.u32 %v153, 4294901760
        %735 = vmatpush1.msra.mxu0 %v734
        %736 = vmatprep.subr.mxu0 0.0
        %v737 = vand.u32 %v154, 4294901760
        %738 = vmatpush1.msra.mxu0 %v737
        %739 = vmatprep.subr.mxu0 0.0
        %v740 = vand.u32 %v155, 4294901760
        %741 = vmatpush1.msra.mxu0 %v740
        %742 = vmatprep.subr.mxu0 0.0
        %v743 = vand.u32 %v156, 4294901760
        %744 = vmatpush1.msra.mxu0 %v743
        %745 = vmatprep.subr.mxu0 0.0
        %v746 = vand.u32 %v157, 4294901760
        %747 = vmatpush1.msra.mxu0 %v746
        %748 = vmatprep.subr.mxu0 0.0
        %v749 = vand.u32 %v158, 4294901760
        %750 = vmatpush1.msra.mxu0 %v749
        %751 = vmatprep.subr.mxu0 0.0
        %v752 = vand.u32 %v159, 4294901760
        %753 = vmatpush1.msra.mxu0 %v752
        %754 = vmatprep.subr.mxu0 0.0
        %v755 = vand.u32 %v160, 4294901760
        %756 = vmatpush1.msra.mxu0 %v755
        %757 = vmatprep.subr.mxu0 0.0
        %v758 = vand.u32 %v161, 4294901760
        %759 = vmatpush1.msra.mxu0 %v758
        %760 = vmatprep.subr.mxu0 0.0
        %v761 = vand.u32 %v162, 4294901760
        %762 = vmatpush1.msra.mxu0 %v761
        %763 = vmatprep.subr.mxu0 0.0
        %v764 = vand.u32 %v163, 4294901760
        %765 = vmatpush1.msra.mxu0 %v764
        %766 = vmatprep.subr.mxu0 0.0
        %767 = vmatpush1.msra.mxu0 0.0
        %768 = vmatprep.subr.mxu0 0.0
        %769 = vmatpush1.msra.mxu0 0.0
        %770 = vmatprep.subr.mxu0 0.0
        %771 = vmatpush1.msra.mxu0 0.0
        %772 = vmatprep.subr.mxu0 0.0
        %773 = vmatpush1.msra.mxu0 0.0
        %774 = vmatprep.subr.mxu0 0.0
        %775 = vmatpush1.msra.mxu0 0.0
        %776 = vmatprep.subr.mxu0 0.0
        %777 = vmatpush1.msra.mxu0 0.0
        %778 = vmatprep.subr.mxu0 0.0
        %779 = vmatpush1.msra.mxu0 0.0
        %780 = vmatprep.subr.mxu0 0.0
        %781 = vmatpush1.msra.mxu0 0.0
        %782 = vmatprep.subr.mxu0 0.0
        %783 = vmatpush1.msra.mxu0 0.0
        %784 = vmatprep.subr.mxu0 0.0
        %785 = vmatpush1.msra.mxu0 0.0
        %786 = vmatprep.subr.mxu0 0.0
        %787 = vmatpush1.msra.mxu0 0.0
        %788 = vmatprep.subr.mxu0 0.0
        %789 = vmatpush1.msra.mxu0 0.0
        %790 = vmatprep.subr.mxu0 0.0
        %791 = vmatpush1.msra.mxu0 0.0
        %792 = vmatprep.subr.mxu0 0.0
        %793 = vmatpush1.msra.mxu0 0.0
        %794 = vmatprep.subr.mxu0 0.0
        %795 = vmatpush1.msra.mxu0 0.0
        %796 = vmatprep.subr.mxu0 0.0
        %797 = vmatpush1.msra.mxu0 0.0
        %798 = vmatprep.mubr.f32.mxu0 0.0
        %v799 = vand.u32 %v147, 4294901760
        %800 = vmatmul.mubr.f32.gmra.mrb[0].mxu0 %v799
        %v801 = vpop.f32.mrb[0].mxu0
        %v802 = vadd.f32 %v715, %v801
        %v803 = vpop.f32.mrb[0].mxu0
        %804 = vdwg.mxu0
        %vm805 = vcmask 392192
        %806 = vst.msk [vmem:[%s134] sm:$0xff] %vm805, %v802
        %s807 = sand.u32 %s71, 1
        %s808 = scalar_lea.sflag [#allocation3], %s807
        %s809 = sand.u32 %s71, 1
        %s810 = smul.addr %s809, 8
        %s811 = scalar_lea.vmem [#allocation2], %s810
        // Predicated region
        $region29: #{tpu_custom_call.1} parent=27 // pred_check
          %p812 = pneg %p81
        $region30: #{tpu_custom_call.1} parent=27 // pred_check_branch
          %814 = sbr.rel (%p812) target = $region32
        $region31: #{tpu_custom_call.1} parent=27 // pred_region
          %s816 = ssub.s32 128, 128
          %817 = vsyncadd %s808, %s816
          %s818 = smul.addr %s16, 128
          %s819 = scalar_lea.hbm %s2, %s818
          %s821 = sshll.u32 %s811, 4
          %s822 = int_to_ptr.vmem [resolvable:$true] %s821
          %824 = dma.vmem_to_hbm [thread:$0]  %s822, 128, %s819, %s808
        $region32: #{tpu_custom_call.1} parent=27 // pred_fallthru
          _
      $region28: #{tpu_custom_call.1} parent=5 // pred_fallthru
        _
      %p825 = scmp.le.s32.totalorder 2, %s11
      // Predicated region
      $region33: #{tpu_custom_call.1} parent=5 // pred_check
        %p826 = pneg %p825
      $region34: #{tpu_custom_call.1} parent=5 // pred_check_branch
        %828 = sbr.rel (%p826) target = $region36
      $region35: #{tpu_custom_call.1} parent=5 // pred_region
        %s829 = ssub.s32 %s11, 2
        // Predicated region
        $region37: #{tpu_custom_call.1} parent=35 // pred_check
          %p830 = pneg %p87
        $region38: #{tpu_custom_call.1} parent=35 // pred_check_branch
          %832 = sbr.rel (%p830) target = $region40
        $region39: #{tpu_custom_call.1} parent=35 // pred_region
          %s833 = sand.u32 %s72, 1
          %s834 = scalar_lea.sflag [#allocation3], %s833
          %s835 = sand.u32 %s72, 1
          %s836 = smul.addr %s835, 8
          %s837 = scalar_lea.vmem [#allocation2], %s836
          %838 = dma.done %s834, 128
        $region40: #{tpu_custom_call.1} parent=35 // pred_fallthru
          _
      $region36: #{tpu_custom_call.1} parent=5 // pred_fallthru
        _
    $region6: #{tpu_custom_call.1} parent=1 // loop_footer
      %s15 = sadd.s32 1, %s11
    $region7: #{tpu_custom_call.1} parent=1 // loop_footer_branch
      %10 = sbr.rel target = $region3
    $region8: #{tpu_custom_call.1} parent=1 // loop_exit
      _
    %839 = vsyncpa [#allocation3], 1
    %s840 = scalar_lea.sflag [#allocation3], 1
    %841 = vsyncpa %s840, 1

</llo_original>
